<compile_context>
chip_gen: v7x
topology: tpu7x:2x2x1
jax: 0.10.0
libtpu: 0.0.40
codegen_flags: <defaults>
</compile_context>

<pallas_src>
import numpy as np
import jax
import jax.numpy as jnp
from jax.experimental import pallas as pl
from jax.experimental.pallas import tpu as pltpu


def _round_up(x, m):
    return (x + m - 1) // m * m


# ----------------------------------------------------------------------------
# Pallas kernel: one (direction, pair-tile) grid point
# ----------------------------------------------------------------------------
def _n_pairs_dense_kernel(q_ref, a_ref, mask_ref, enc_ref, o_ref):
    """Blocks:
      q_ref    (1, tile_p, D_pad)  query rows  = enc_other[positive[0]]
      a_ref    (1, tile_p, D_pad)  anchor rows = enc_self[anchor]
      mask_ref (1, tile_p, N_pad)  1.0 where column j is a neighbor key of pair i
      enc_ref  (1, D_pad, N_pad)   transposed "other" encoding table (VMEM slab)
      o_ref    (1, 1, 1, N_pad)    per-lane partial loss sums for this tile
    """
    q = q_ref[0]          # (tile_p, D_pad)
    a = a_ref[0]          # (tile_p, D_pad)
    mask = mask_ref[0]    # (tile_p, N_pad)
    enc_t = enc_ref[0]    # (D_pad, N_pad)

    # Dense, 128-aligned MXU contractions against the full encoding table.
    logits = jnp.dot(q, enc_t, preferred_element_type=jnp.float32)  # (tile_p, N_pad)
    pos = jnp.dot(a, enc_t, preferred_element_type=jnp.float32)     # (tile_p, N_pad)

    is_key = mask > 0.0
    neg_big = jnp.float32(-1e30)

    # Masked softmax over each pair's neighbor columns:
    #   weight = K_i * softmax(query . key) restricted to neighbor columns.
    row_max = jnp.max(jnp.where(is_key, logits, neg_big), axis=-1, keepdims=True)
    e = jnp.exp(jnp.where(is_key, logits - row_max, neg_big))       # 0 off-mask
    denom = jnp.sum(e, axis=-1, keepdims=True)
    k_count = jnp.sum(mask, axis=-1, keepdims=True)
    inv_denom = jnp.where(denom > 0.0, 1.0 / denom, 0.0)            # exact recip
    weight = k_count * e * inv_denom                                 # (tile_p, N_pad)

    x = weight * (pos - 1.0) ** 2                                    # (tile_p, N_pad)

    # Only the cheap cross-sublane (pair-axis) reduce here; the cross-lane
    # reduce + the 1/count normalization happen once in the wrapper.
    o_ref[0, 0] = jnp.sum(x, axis=0, keepdims=True)                  # (1, N_pad)


# ----------------------------------------------------------------------------
# VMEM-budget driven tile selection (generation aware)
# ----------------------------------------------------------------------------
def _vmem_plan(P, D_pad, N_pad, max_tile_pairs=None):
    try:
        cap = int(pltpu.get_tpu_info().vmem_capacity_bytes)
    except Exception:
        cap = 0
    if cap <= 0:
        cap = 64 * 1024 * 1024            # conservative (v7x per-TC) fallback
    vmem_limit = int(cap * 0.75)          # ~48 MiB on v7x, ~96 MiB on v5e/v6e
    budget = int(vmem_limit * 0.8)        # headroom for temporaries / regalloc

    enc_bytes = 2 * D_pad * N_pad * 4     # double-buffered transposed enc slab
    # per-pair bytes: double-buffered q + a blocks, double-buffered mask block,
    # plus ~4 live (tile_p, N_pad) f32 temporaries (logits / pos / e / weight).
    per_pair = (2 * 2 * D_pad + (2 + 4) * N_pad) * 4
    avail = budget - enc_bytes
    # TODO(synk): tile over N with an online (flash-style) masked softmax when
    # the encoding table itself does not fit the VMEM budget.
    assert avail >= per_pair * 8, (
        "encoding table too large for the single-slab VMEM plan")

    tile_p = max(8, min(1024, (avail // per_pair) // 8 * 8))
    if max_tile_pairs is not None:
        tile_p = min(tile_p, max(8, (max_tile_pairs // 8) * 8))
    tile_p = min(tile_p, _round_up(max(P, 1), 8))
    return tile_p, vmem_limit


# ----------------------------------------------------------------------------
# Forward wrapper (the negative_sampler host loop is replaced by an equivalent
# XLA adjacency-column mask gather — same neighbor sets, no host round trip)
# ----------------------------------------------------------------------------
def relational_neighbor_contrast_loss(typeA_idx, typeB_idx,
                                      typeA_encoding, typeB_encoding,
                                      typeA_adj, typeB_adj, *,
                                      max_tile_pairs=None):
    a_idx = jnp.asarray(typeA_idx, jnp.int32)
    b_idx = jnp.asarray(typeB_idx, jnp.int32)
    # TODO(synk): optionally keep bf16 encodings as bf16 matmul operands
    # (f32 accumulation via preferred_element_type) to halve HBM bytes.
    enc_a = jnp.asarray(typeA_encoding, jnp.float32)
    enc_b = jnp.asarray(typeB_encoding, jnp.float32)
    adj_a = jnp.asarray(typeA_adj)
    adj_b = jnp.asarray(typeB_adj)

    assert a_idx.shape[0] == b_idx.shape[0], "paired index lists must match"
    P = int(a_idx.shape[0])
    NA, D = enc_a.shape
    NB, Db = enc_b.shape
    assert D == Db

    D_pad = _round_up(D, 128)
    N_pad = _round_up(max(NA, NB), 128)
    tile_p, vmem_limit = _vmem_plan(P, D_pad, N_pad, max_tile_pairs)
    n_tiles = -(-P // tile_p)
    P_pad = n_tiles * tile_p

    def pad_rows_cols(x, rows, cols):
        return jnp.pad(x, ((0, rows - x.shape[0]), (0, cols - x.shape[1])))

    enc_a_p = pad_rows_cols(enc_a, N_pad, D_pad)     # (N_pad, D_pad)
    enc_b_p = pad_rows_cols(enc_b, N_pad, D_pad)

    def build_direction(enc_self_p, enc_other_p, adj_other, self_idx, other_idx):
        # queries = enc_other[positive[0]]; anchors = enc_self[anchor];
        # neighbor mask row i = (adj_other[:, other_idx[i]] != 0)
        q = jnp.take(enc_other_p, other_idx, axis=0)                 # (P, D_pad)
        an = jnp.take(enc_self_p, self_idx, axis=0)                  # (P, D_pad)
        m = (jnp.take(jnp.transpose(adj_other), other_idx, axis=0) != 0
             ).astype(jnp.float32)                                   # (P, N_other)
        q = jnp.pad(q, ((0, P_pad - P), (0, 0)))
        an = jnp.pad(an, ((0, P_pad - P), (0, 0)))
        m = jnp.pad(m, ((0, P_pad - P), (0, N_pad - m.shape[1])))
        return q, an, m, jnp.transpose(enc_other_p)                  # (D_pad, N_pad)

    # Direction A: anchors from typeA, queries/keys from typeB (typeB_adj mask).
    qA, anA, mA, encA_t = build_direction(enc_a_p, enc_b_p, adj_b, a_idx, b_idx)
    # Direction B: anchors from typeB, queries/keys from typeA (typeA_adj mask).
    qB, anB, mB, encB_t = build_direction(enc_b_p, enc_a_p, adj_a, b_idx, a_idx)

    q_all = jnp.stack([qA, qB])            # (2, P_pad, D_pad)
    a_all = jnp.stack([anA, anB])          # (2, P_pad, D_pad)
    m_all = jnp.stack([mA, mB])            # (2, P_pad, N_pad)
    e_all = jnp.stack([encA_t, encB_t])    # (2, D_pad, N_pad)

    out = pl.pallas_call(
        _n_pairs_dense_kernel,
        out_shape=jax.ShapeDtypeStruct((2, n_tiles, 1, N_pad), jnp.float32),
        grid_spec=pltpu.PrefetchScalarGridSpec(
            num_scalar_prefetch=0,
            grid=(2, n_tiles),
            in_specs=[
                pl.BlockSpec((1, tile_p, D_pad), lambda d, p: (d, p, 0)),
                pl.BlockSpec((1, tile_p, D_pad), lambda d, p: (d, p, 0)),
                pl.BlockSpec((1, tile_p, N_pad), lambda d, p: (d, p, 0)),
                # Encoding slab: block index constant across pair tiles, so it
                # stays VMEM-resident within a direction (no re-DMA per tile).
                pl.BlockSpec((1, D_pad, N_pad), lambda d, p: (d, 0, 0)),
            ],
            out_specs=pl.BlockSpec((1, 1, 1, N_pad), lambda d, p: (d, p, 0, 0)),
        ),
        compiler_params=pltpu.CompilerParams(
            dimension_semantics=("parallel", "parallel"),
            vmem_limit_bytes=vmem_limit,
        ),
    )(q_all, a_all, m_all, e_all)

    # Final (tiny) reductions in XLA: lane/tile sums + per-direction 1/count.
    per_dir = jnp.sum(out, axis=(1, 2, 3))                                  # (2,)
    counts = 1.0 + jnp.sum((jnp.sum(m_all, axis=-1) > 0).astype(jnp.float32),
                           axis=-1)                                         # (2,)
    return jnp.sum(per_dir / counts)


# ----------------------------------------------------------------------------
# Pure-numpy reference (faithful transcription of the PyTorch forward)
# ----------------------------------------------------------------------------
def _reference_loss(typeA_idx, typeB_idx, typeA_encoding, typeB_encoding,
                    typeA_adj, typeB_adj):
    a_idx = np.asarray(typeA_idx)
    b_idx = np.asarray(typeB_idx)
    enc_a = np.asarray(typeA_encoding, np.float64)
    enc_b = np.asarray(typeB_encoding, np.float64)
    adj_a = np.asarray(typeA_adj)
    adj_b = np.asarray(typeB_adj)

    def one_direction(self_idx, other_idx, enc_self, enc_other, adj_other):
        loss, count = 0.0, 1.0
        for i in range(len(self_idx)):
            anchor = enc_self[self_idx[i], :]
            query = enc_other[other_idx[i], :]
            nbrs = np.where(adj_other[:, other_idx[i]] != 0)[0]
            if nbrs.size == 0:
                continue
            keys = enc_other[nbrs, :]
            logits = query @ keys.T
            sm = np.exp(logits - logits.max())
            sm = sm / sm.sum()
            weight = len(keys) * sm
            pos = anchor @ keys.T
            loss += float(np.sum(weight * (pos - 1.0) ** 2))
            count += 1.0
        return loss / count

    return (one_direction(a_idx, b_idx, enc_a, enc_b, adj_b)
            + one_direction(b_idx, a_idx, enc_b, enc_a, adj_a))


# ----------------------------------------------------------------------------
# Main
# ----------------------------------------------------------------------------
if __name__ == "__main__":
    NA, NB, D = 12, 16, 32     # number of type-A / type-B nodes, feature dim
    P = 16                     # number of (A, B) pairs
    K = 4                      # neighbors per adjacency column (fixed here)

    key = jax.random.PRNGKey(0)
    k1, k2, k3, k4, k5, k6 = jax.random.split(key, 6)

    typeA_encoding = jax.random.normal(k1, (NA, D), jnp.float32)
    typeB_encoding = jax.random.normal(k2, (NB, D), jnp.float32)
    typeA_idx = jax.random.randint(k3, (P,), 0, NA, dtype=jnp.int32)
    typeB_idx = jax.random.randint(k4, (P,), 0, NB, dtype=jnp.int32)

    def make_adj(k, n, n_neighbors):
        adj = np.zeros((n, n), dtype=np.float32)
        col_keys = jax.random.split(k, n)
        for c in range(n):
            rows = np.asarray(jax.random.permutation(col_keys[c], n)[:n_neighbors])
            adj[rows, c] = 1.0
        return jnp.asarray(adj)

    typeA_adj = make_adj(k5, NA, K)   # (NA, NA), exactly K nonzeros per column
    typeB_adj = make_adj(k6, NB, K)   # (NB, NB), exactly K nonzeros per column

    # max_tile_pairs=8 -> two pair tiles per direction: grid (2, 2), exercising
    # the tiled / fully-parallel path even at this toy size.
    loss = relational_neighbor_contrast_loss(
        typeA_idx, typeB_idx, typeA_encoding, typeB_encoding,
        typeA_adj, typeB_adj, max_tile_pairs=8)
    loss = jax.block_until_ready(loss)

    ref = _reference_loss(typeA_idx, typeB_idx, typeA_encoding, typeB_encoding,
                          typeA_adj, typeB_adj)
    np.testing.assert_allclose(float(loss), ref, rtol=5e-3, atol=5e-3)

    print("KERNEL_OK")
</pallas_src>

<mosaic_0001>
module attributes {stable_mosaic.version = 11 : i64} {
  func.func @_n_pairs_dense_kernel(%arg0: i32, %arg1: i32, %arg2: memref<1x8x128xf32, #tpu.memory_space<vmem>>, %arg3: memref<1x8x128xf32, #tpu.memory_space<vmem>>, %arg4: memref<1x8x128xf32, #tpu.memory_space<vmem>>, %arg5: memref<1x128x128xf32, #tpu.memory_space<vmem>>, %arg6: memref<1x1x1x128xf32, #tpu.memory_space<vmem>>) attributes {dimension_semantics = [#tpu.dimension_semantics<parallel>, #tpu.dimension_semantics<parallel>], iteration_bounds = array<i64: 2, 2>, scalar_prefetch = 0 : i64, scratch_operands = 0 : i64, tpu.core_type = #tpu.core_type<tc>, window_params = [{transform_indices = @transform_0, window_bounds = array<i64: 1, 8, 128>}, {transform_indices = @transform_1, window_bounds = array<i64: 1, 8, 128>}, {transform_indices = @transform_2, window_bounds = array<i64: 1, 8, 128>}, {transform_indices = @transform_3, window_bounds = array<i64: 1, 128, 128>}, {transform_indices = @transform_4, window_bounds = array<i64: 1, 1, 1, 128>}]} {
    %c0 = arith.constant 0 : index
    %c0_0 = arith.constant 0 : index
    %c0_1 = arith.constant 0 : index
    %0 = vector.load %arg2[%c0, %c0_0, %c0_1] : memref<1x8x128xf32, #tpu.memory_space<vmem>>, vector<1x8x128xf32>
    %1 = vector.shape_cast %0 : vector<1x8x128xf32> to vector<8x128xf32>
    %c0_2 = arith.constant 0 : index
    %c0_3 = arith.constant 0 : index
    %c0_4 = arith.constant 0 : index
    %2 = vector.load %arg3[%c0_2, %c0_3, %c0_4] : memref<1x8x128xf32, #tpu.memory_space<vmem>>, vector<1x8x128xf32>
    %3 = vector.shape_cast %2 : vector<1x8x128xf32> to vector<8x128xf32>
    %c0_5 = arith.constant 0 : index
    %c0_6 = arith.constant 0 : index
    %c0_7 = arith.constant 0 : index
    %4 = vector.load %arg4[%c0_5, %c0_6, %c0_7] : memref<1x8x128xf32, #tpu.memory_space<vmem>>, vector<1x8x128xf32>
    %5 = vector.shape_cast %4 : vector<1x8x128xf32> to vector<8x128xf32>
    %c0_8 = arith.constant 0 : index
    %c0_9 = arith.constant 0 : index
    %c0_10 = arith.constant 0 : index
    %6 = vector.load %arg5[%c0_8, %c0_9, %c0_10] : memref<1x128x128xf32, #tpu.memory_space<vmem>>, vector<1x128x128xf32>
    %7 = vector.shape_cast %6 : vector<1x128x128xf32> to vector<128x128xf32>
    %cst = arith.constant dense<0.000000e+00> : vector<8x128xf32>
    %8 = tpu.matmul %1, %7, %cst {dimension_numbers = #tpu.dot_dimension_numbers<[1], [0], [0], [1], [0, 0, 1, 1], [], []>} : vector<8x128xf32>, vector<128x128xf32>, vector<8x128xf32> -> vector<8x128xf32>
    %cst_11 = arith.constant dense<0.000000e+00> : vector<8x128xf32>
    %9 = tpu.matmul %3, %7, %cst_11 {dimension_numbers = #tpu.dot_dimension_numbers<[1], [0], [0], [1], [0, 0, 1, 1], [], []>} : vector<8x128xf32>, vector<128x128xf32>, vector<8x128xf32> -> vector<8x128xf32>
    %cst_12 = arith.constant 0.000000e+00 : f32
    %10 = vector.broadcast %cst_12 : f32 to vector<8x128xf32>
    %11 = arith.cmpf ogt, %5, %10 : vector<8x128xf32>
    %cst_13 = arith.constant -1.000000e+30 : f32
    %12 = vector.broadcast %cst_13 : f32 to vector<8x128xf32>
    %13 = arith.select %11, %8, %12 : vector<8x128xi1>, vector<8x128xf32>
    %cst_14 = arith.constant dense<0xFF800000> : vector<8xf32>
    %14 = vector.multi_reduction <maximumf>, %13, %cst_14 [1] : vector<8x128xf32> to vector<8xf32>
    %15 = vector.shape_cast %14 : vector<8xf32> to vector<8x1xf32>
    %16 = vector.broadcast %15 : vector<8x1xf32> to vector<8x128xf32>
    %17 = arith.subf %8, %16 : vector<8x128xf32>
    %cst_15 = arith.constant -1.000000e+30 : f32
    %18 = vector.broadcast %cst_15 : f32 to vector<8x128xf32>
    %19 = arith.select %11, %17, %18 : vector<8x128xi1>, vector<8x128xf32>
    %20 = math.exp %19 : vector<8x128xf32>
    %cst_16 = arith.constant dense<0.000000e+00> : vector<8xf32>
    %21 = vector.multi_reduction <add>, %20, %cst_16 [1] : vector<8x128xf32> to vector<8xf32>
    %22 = vector.shape_cast %21 : vector<8xf32> to vector<8x1xf32>
    %cst_17 = arith.constant dense<0.000000e+00> : vector<8xf32>
    %23 = vector.multi_reduction <add>, %5, %cst_17 [1] : vector<8x128xf32> to vector<8xf32>
    %24 = vector.shape_cast %23 : vector<8xf32> to vector<8x1xf32>
    %cst_18 = arith.constant 0.000000e+00 : f32
    %25 = vector.broadcast %cst_18 : f32 to vector<8x1xf32>
    %26 = arith.cmpf ogt, %22, %25 : vector<8x1xf32>
    %cst_19 = arith.constant 1.000000e+00 : f32
    %27 = vector.broadcast %cst_19 : f32 to vector<8x1xf32>
    %28 = arith.divf %27, %22 : vector<8x1xf32>
    %cst_20 = arith.constant 0.000000e+00 : f32
    %29 = vector.broadcast %cst_20 : f32 to vector<8x1xf32>
    %30 = arith.select %26, %28, %29 : vector<8x1xi1>, vector<8x1xf32>
    %31 = vector.broadcast %24 : vector<8x1xf32> to vector<8x128xf32>
    %32 = arith.mulf %31, %20 : vector<8x128xf32>
    %33 = vector.broadcast %30 : vector<8x1xf32> to vector<8x128xf32>
    %34 = arith.mulf %32, %33 : vector<8x128xf32>
    %cst_21 = arith.constant 1.000000e+00 : f32
    %35 = vector.broadcast %cst_21 : f32 to vector<8x128xf32>
    %36 = arith.subf %9, %35 : vector<8x128xf32>
    %37 = arith.mulf %36, %36 : vector<8x128xf32>
    %38 = arith.mulf %34, %37 : vector<8x128xf32>
    %cst_22 = arith.constant dense<0.000000e+00> : vector<128xf32>
    %39 = vector.multi_reduction <add>, %38, %cst_22 [0] : vector<8x128xf32> to vector<128xf32>
    %40 = vector.shape_cast %39 : vector<128xf32> to vector<1x128xf32>
    %c0_23 = arith.constant 0 : index
    %c0_24 = arith.constant 0 : index
    %c0_25 = arith.constant 0 : index
    %c0_26 = arith.constant 0 : index
    %41 = vector.load %arg6[%c0_23, %c0_24, %c0_25, %c0_26] : memref<1x1x1x128xf32, #tpu.memory_space<vmem>>, vector<1x1x1x128xf32>
    %42 = vector.shape_cast %41 : vector<1x1x1x128xf32> to vector<1x128xf32>
    %43 = vector.shape_cast %40 : vector<1x128xf32> to vector<1x1x1x128xf32>
    tpu.vector_store %arg6[%c0_23, %c0_24, %c0_25, %c0_26], %43 {strides = array<i32>} : memref<1x1x1x128xf32, #tpu.memory_space<vmem>>, vector<1x1x1x128xf32>,
    return
  }
  func.func @transform_0(%arg0: i32, %arg1: i32) -> (i32, i32, i32) {
    %c0_i32 = arith.constant 0 : i32
    %c0_i32_0 = arith.constant 0 : i32
    return %arg0, %arg1, %c0_i32 : i32, i32, i32
  }
  func.func @transform_1(%arg0: i32, %arg1: i32) -> (i32, i32, i32) {
    %c0_i32 = arith.constant 0 : i32
    %c0_i32_0 = arith.constant 0 : i32
    return %arg0, %arg1, %c0_i32 : i32, i32, i32
  }
  func.func @transform_2(%arg0: i32, %arg1: i32) -> (i32, i32, i32) {
    %c0_i32 = arith.constant 0 : i32
    %c0_i32_0 = arith.constant 0 : i32
    return %arg0, %arg1, %c0_i32 : i32, i32, i32
  }
  func.func @transform_3(%arg0: i32, %arg1: i32) -> (i32, i32, i32) {
    %c0_i32 = arith.constant 0 : i32
    %c0_i32_0 = arith.constant 0 : i32
    %c0_i32_1 = arith.constant 0 : i32
    return %arg0, %c0_i32, %c0_i32_0 : i32, i32, i32
  }
  func.func @transform_4(%arg0: i32, %arg1: i32) -> (i32, i32, i32, i32) {
    %c0_i32 = arith.constant 0 : i32
    %c0_i32_0 = arith.constant 0 : i32
    %c0_i32_1 = arith.constant 0 : i32
    return %arg0, %arg1, %c0_i32, %c0_i32_0 : i32, i32, i32, i32
  }
}

</mosaic_0001>

<llo_original>
// kernel: tpu_custom_call.1
$region0: #{tpu_custom_call.1}
  #allocation0 [shape = 'u32[]', space=smem, size = 0x4, offset = 0x4, fixed_abs, tag = 'smem constant byte address 0x4 - core index']
  #allocation1 [shape = 'u32[144,128]{1,0:T(1,128)}', space=vmem, size = 0x12000, scoped, tag = 'internal scratch']
  %s0 = inlined_call_operand.hbm [shape: f32[2,16,128], index: 0, kind: input, shape index: {}]
  %s1 = inlined_call_operand.hbm [shape: f32[2,16,128], index: 1, kind: input, shape index: {}]
  %s2 = inlined_call_operand.hbm [shape: f32[2,16,128], index: 2, kind: input, shape index: {}]
  %s3 = inlined_call_operand.hbm [shape: f32[2,128,128], index: 3, kind: input, shape index: {}]
  %s4 = inlined_call_operand.hbm [shape: f32[2,2,1,128], index: 4, kind: output, shape index: {}]
  %s5 = sld [smem:[#allocation0]]
  $region65: #{tpu_custom_call.1} parent=0
    _
  %s7 = ssub.s32 1, %s5
  %s8 = scalar_select 0, %s7, %s5
  $region1: #{tpu_custom_call.1} parent=0
    #allocation2 [shape = 'u8[8192]{0}', space=vmem, size = 0x2000, scoped, tag = 'input window, operand 0']
    #allocation3 [shape = 's32[2]{0}', space=sflag, size = 0x8, scoped, tag = 'scoped memory for tpu_custom_call.1']
    #allocation4 [shape = 's32[2]{0}', space=sflag, size = 0x8, scoped, tag = 'scoped memory for tpu_custom_call.1']
    #allocation5 [shape = 'u8[8192]{0}', space=vmem, size = 0x2000, scoped, tag = 'input window, operand 1']
    #allocation6 [shape = 's32[2]{0}', space=sflag, size = 0x8, scoped, tag = 'scoped memory for tpu_custom_call.1']
    #allocation7 [shape = 'u8[8192]{0}', space=vmem, size = 0x2000, scoped, tag = 'input window, operand 2']
    #allocation8 [shape = 'u8[131072]{0}', space=vmem, size = 0x20000, scoped, tag = 'input window, operand 3']
    #allocation9 [shape = 's32[2]{0}', space=sflag, size = 0x8, scoped, tag = 'scoped memory for tpu_custom_call.1']
    #allocation10 [shape = 'u8[1024]{0}', space=vmem, size = 0x400, scoped, tag = 'output window, operand 0']
    %9 = vsyncpa [#allocation3], 0
    %s10 = scalar_lea.sflag [#allocation3], 1
    %11 = vsyncpa %s10, 0
    %12 = vsyncpa [#allocation6], 0
    %s13 = scalar_lea.sflag [#allocation6], 1
    %14 = vsyncpa %s13, 0
    %15 = vsyncpa [#allocation9], 0
    %s16 = scalar_lea.sflag [#allocation9], 1
    %17 = vsyncpa %s16, 0
    %18 = vsyncpa [#allocation4], 0
    %s19 = scalar_lea.sflag [#allocation4], 1
    %20 = vsyncpa %s19, 0
    loop: start=0, step=1, limit=6
    $region2: #{tpu_custom_call.1} parent=1 // loop_pre_header
      _
    $region3: #{tpu_custom_call.1} parent=1 // loop_header
      %s22 = sphi 0, %s26
      %p23 = scmp.ge.s32.totalorder %s22, 6
      %s29 = sphi 0, %s41
      %s30 = sphi 0, %s37
      %s31 = sphi 0, %s29
      %s32 = sphi 0, %s30
      %s33 = sphi 0, %s31
      %s34 = sphi 0, %s32
      %s46 = sphi 0, %s48
      %s49 = sphi 0, %s46
      %s50 = sphi 0, %s49
      %s66 = sphi 0, %s50
      %s74 = sphi 0, %s76
      %s77 = sphi 0, %s74
      %s78 = sphi 0, %s77
      %s94 = sphi 0, %s78
      %s102 = sphi 0, %s104
      %s105 = sphi 0, %s102
      %s106 = sphi 0, %s105
      %s122 = sphi 0, %s106
      %s128 = sphi 0, %s130
      %s131 = sphi 0, %s128
      %s132 = sphi 0, %s131
      %s148 = sphi 0, %s132
      %s156 = sphi 0, %s158
      %s159 = sphi 0, %s156
      %s160 = sphi 0, %s159
      %s176 = sphi 0, %s160
    $region4: #{tpu_custom_call.1} parent=1 // loop_header_branch
      %25 = sbr.rel (%p23) target = $region8
    $region5: #{tpu_custom_call.1} parent=1 // loop_body
      %s27 = ssub.s32 %s22, 1
      %s28 = ssub.s32 %s22, 2
      %s35 = sadd.s32 1, %s30
      %p36 = scmp.ge.s32.totalorder %s35, 2
      %s37 = scalar_select %p36, 0, %s35
      %s38 = sadd.s32 1, %s29
      %s39 = scalar_select %p36, %s38, %s29
      %p40 = scmp.ge.s32.totalorder %s39, 2
      %s41 = scalar_select %p40, 0, %s39
      %s42 = ssub.s32 %s29, %s41
      %s43 = ssub.s32 %s30, %s37
      %s44 = sor.u32 %s42, %s43
      %p45 = scmp.eq.s32.totalorder %s44, 0
      %s47 = sadd.s32 %s46, 1
      %s48 = scalar_select %p45, %s46, %s47
      %p51 = pneg %p45
      %p52 = scmp.eq.s32.totalorder %s22, 3
      %p53 = por %p51, %p52
      %p54 = scmp.ne.s32.totalorder %s46, %s49
      %p55 = scmp.eq.s32.totalorder %s22, 0
      %p56 = por %p54, %p55
      %p57 = scmp.ne.s32.totalorder %s46, %s49
      %p58 = scmp.eq.s32.totalorder %s27, 3
      %p59 = por %p57, %p58
      %p60 = scmp.ne.s32.totalorder %s49, %s50
      %p61 = scmp.eq.s32.totalorder %s27, 0
      %p62 = por %p60, %p61
      %p63 = scmp.ne.s32.totalorder %s49, %s50
      %p64 = scmp.eq.s32.totalorder %s28, 3
      %p65 = por %p63, %p64
      %p67 = scmp.ne.s32.totalorder %s50, %s66
      %p68 = scmp.eq.s32.totalorder %s28, 0
      %p69 = por %p67, %p68
      %s70 = ssub.s32 %s29, %s41
      %s71 = ssub.s32 %s30, %s37
      %s72 = sor.u32 %s70, %s71
      %p73 = scmp.eq.s32.totalorder %s72, 0
      %s75 = sadd.s32 %s74, 1
      %s76 = scalar_select %p73, %s74, %s75
      %p79 = pneg %p73
      %p80 = scmp.eq.s32.totalorder %s22, 3
      %p81 = por %p79, %p80
      %p82 = scmp.ne.s32.totalorder %s74, %s77
      %p83 = scmp.eq.s32.totalorder %s22, 0
      %p84 = por %p82, %p83
      %p85 = scmp.ne.s32.totalorder %s74, %s77
      %p86 = scmp.eq.s32.totalorder %s27, 3
      %p87 = por %p85, %p86
      %p88 = scmp.ne.s32.totalorder %s77, %s78
      %p89 = scmp.eq.s32.totalorder %s27, 0
      %p90 = por %p88, %p89
      %p91 = scmp.ne.s32.totalorder %s77, %s78
      %p92 = scmp.eq.s32.totalorder %s28, 3
      %p93 = por %p91, %p92
      %p95 = scmp.ne.s32.totalorder %s78, %s94
      %p96 = scmp.eq.s32.totalorder %s28, 0
      %p97 = por %p95, %p96
      %s98 = ssub.s32 %s29, %s41
      %s99 = ssub.s32 %s30, %s37
      %s100 = sor.u32 %s98, %s99
      %p101 = scmp.eq.s32.totalorder %s100, 0
      %s103 = sadd.s32 %s102, 1
      %s104 = scalar_select %p101, %s102, %s103
      %p107 = pneg %p101
      %p108 = scmp.eq.s32.totalorder %s22, 3
      %p109 = por %p107, %p108
      %p110 = scmp.ne.s32.totalorder %s102, %s105
      %p111 = scmp.eq.s32.totalorder %s22, 0
      %p112 = por %p110, %p111
      %p113 = scmp.ne.s32.totalorder %s102, %s105
      %p114 = scmp.eq.s32.totalorder %s27, 3
      %p115 = por %p113, %p114
      %p116 = scmp.ne.s32.totalorder %s105, %s106
      %p117 = scmp.eq.s32.totalorder %s27, 0
      %p118 = por %p116, %p117
      %p119 = scmp.ne.s32.totalorder %s105, %s106
      %p120 = scmp.eq.s32.totalorder %s28, 3
      %p121 = por %p119, %p120
      %p123 = scmp.ne.s32.totalorder %s106, %s122
      %p124 = scmp.eq.s32.totalorder %s28, 0
      %p125 = por %p123, %p124
      %s126 = ssub.s32 %s29, %s41
      %p127 = scmp.eq.s32.totalorder %s126, 0
      %s129 = sadd.s32 %s128, 1
      %s130 = scalar_select %p127, %s128, %s129
      %p133 = pneg %p127
      %p134 = scmp.eq.s32.totalorder %s22, 3
      %p135 = por %p133, %p134
      %p136 = scmp.ne.s32.totalorder %s128, %s131
      %p137 = scmp.eq.s32.totalorder %s22, 0
      %p138 = por %p136, %p137
      %p139 = scmp.ne.s32.totalorder %s128, %s131
      %p140 = scmp.eq.s32.totalorder %s27, 3
      %p141 = por %p139, %p140
      %p142 = scmp.ne.s32.totalorder %s131, %s132
      %p143 = scmp.eq.s32.totalorder %s27, 0
      %p144 = por %p142, %p143
      %p145 = scmp.ne.s32.totalorder %s131, %s132
      %p146 = scmp.eq.s32.totalorder %s28, 3
      %p147 = por %p145, %p146
      %p149 = scmp.ne.s32.totalorder %s132, %s148
      %p150 = scmp.eq.s32.totalorder %s28, 0
      %p151 = por %p149, %p150
      %s152 = ssub.s32 %s29, %s41
      %s153 = ssub.s32 %s30, %s37
      %s154 = sor.u32 %s152, %s153
      %p155 = scmp.eq.s32.totalorder %s154, 0
      %s157 = sadd.s32 %s156, 1
      %s158 = scalar_select %p155, %s156, %s157
      %p161 = pneg %p155
      %p162 = scmp.eq.s32.totalorder %s22, 3
      %p163 = por %p161, %p162
      %p164 = scmp.ne.s32.totalorder %s156, %s159
      %p165 = scmp.eq.s32.totalorder %s22, 0
      %p166 = por %p164, %p165
      %p167 = scmp.ne.s32.totalorder %s156, %s159
      %p168 = scmp.eq.s32.totalorder %s27, 3
      %p169 = por %p167, %p168
      %p170 = scmp.ne.s32.totalorder %s159, %s160
      %p171 = scmp.eq.s32.totalorder %s27, 0
      %p172 = por %p170, %p171
      %p173 = scmp.ne.s32.totalorder %s159, %s160
      %p174 = scmp.eq.s32.totalorder %s28, 3
      %p175 = por %p173, %p174
      %p177 = scmp.ne.s32.totalorder %s160, %s176
      %p178 = scmp.eq.s32.totalorder %s28, 0
      %p179 = por %p177, %p178
      %p180 = scmp.le.s32.totalorder 1, %s22
      %p181 = scmp.lt.s32.totalorder %s22, 5
      %p182 = pnand %p180, %p181
      %p183 = pneg %p182
      // Predicated region
      $region9: #{tpu_custom_call.1} parent=5 // pred_check
        _
      $region10: #{tpu_custom_call.1} parent=5 // pred_check_branch
        %185 = sbr.rel (%p182) target = $region12
      $region11: #{tpu_custom_call.1} parent=5 // pred_region
        %s186 = ssub.s32 %s22, 1
      $region12: #{tpu_custom_call.1} parent=5 // pred_fallthru
        _
      %p187 = scmp.lt.s32.totalorder %s22, 4
      // Predicated region
      $region13: #{tpu_custom_call.1} parent=5 // pred_check
        %p188 = pneg %p187
      $region14: #{tpu_custom_call.1} parent=5 // pred_check_branch
        %190 = sbr.rel (%p188) target = $region16
      $region15: #{tpu_custom_call.1} parent=5 // pred_region
        // Predicated region
        $region17: #{tpu_custom_call.1} parent=15 // pred_check
          %p191 = pneg %p56
        $region18: #{tpu_custom_call.1} parent=15 // pred_check_branch
          %193 = sbr.rel (%p191) target = $region20
        $region19: #{tpu_custom_call.1} parent=15 // pred_region
          %s194 = sand.u32 %s46, 1
          %s195 = scalar_lea.sflag [#allocation3], %s194
          %s196 = sand.u32 %s46, 1
          %s197 = smul.addr %s196, 8
          %s198 = scalar_lea.vmem [#allocation2], %s197
          %s200 = ssub.s32 128, 128
          %201 = vsyncadd %s195, %s200
          %s202 = smul.addr %s29, 2
          %s203 = sadd.s32 %s30, %s202
          %s204 = smul.addr %s203, 128
          %s205 = scalar_lea.hbm %s0, %s204
          %s207 = sshll.u32 %s198, 4
          %s208 = int_to_ptr.vmem [resolvable:$true] %s207
          %210 = dma.hbm_to_vmem [thread:$0]  %s205, 128, %s208, %s195
        $region20: #{tpu_custom_call.1} parent=15 // pred_fallthru
          _
        // Predicated region
        $region21: #{tpu_custom_call.1} parent=15 // pred_check
          %p211 = pneg %p84
        $region22: #{tpu_custom_call.1} parent=15 // pred_check_branch
          %213 = sbr.rel (%p211) target = $region24
        $region23: #{tpu_custom_call.1} parent=15 // pred_region
          %s214 = sand.u32 %s22, 1
          %s215 = scalar_lea.sflag [#allocation6], %s214
          %s216 = sand.u32 %s74, 1
          %s217 = smul.addr %s216, 8
          %s218 = scalar_lea.vmem [#allocation5], %s217
          %s220 = ssub.s32 128, 128
          %221 = vsyncadd %s215, %s220
          %s222 = smul.addr %s29, 2
          %s223 = sadd.s32 %s30, %s222
          %s224 = smul.addr %s223, 128
          %s225 = scalar_lea.hbm %s1, %s224
          %s227 = sshll.u32 %s218, 4
          %s228 = int_to_ptr.vmem [resolvable:$true] %s227
          %230 = dma.hbm_to_vmem [thread:$0]  %s225, 128, %s228, %s215
        $region24: #{tpu_custom_call.1} parent=15 // pred_fallthru
          _
        // Predicated region
        $region25: #{tpu_custom_call.1} parent=15 // pred_check
          %p231 = pneg %p112
        $region26: #{tpu_custom_call.1} parent=15 // pred_check_branch
          %233 = sbr.rel (%p231) target = $region28
        $region27: #{tpu_custom_call.1} parent=15 // pred_region
          %s234 = sand.u32 %s22, 1
          %s235 = scalar_lea.sflag [#allocation6], %s234
          %s236 = sand.u32 %s102, 1
          %s237 = smul.addr %s236, 8
          %s238 = scalar_lea.vmem [#allocation7], %s237
          %s240 = ssub.s32 128, 128
          %241 = vsyncadd %s235, %s240
          %s242 = smul.addr %s29, 2
          %s243 = sadd.s32 %s30, %s242
          %s244 = smul.addr %s243, 128
          %s245 = scalar_lea.hbm %s2, %s244
          %s247 = sshll.u32 %s238, 4
          %s248 = int_to_ptr.vmem [resolvable:$true] %s247
          %250 = dma.hbm_to_vmem [thread:$0]  %s245, 128, %s248, %s235
        $region28: #{tpu_custom_call.1} parent=15 // pred_fallthru
          _
        // Predicated region
        $region29: #{tpu_custom_call.1} parent=15 // pred_check
          %p251 = pneg %p138
        $region30: #{tpu_custom_call.1} parent=15 // pred_check_branch
          %253 = sbr.rel (%p251) target = $region32
        $region31: #{tpu_custom_call.1} parent=15 // pred_region
          %s254 = sand.u32 %s128, 1
          %s255 = scalar_lea.sflag [#allocation9], %s254
          %s256 = sand.u32 %s128, 1
          %s257 = smul.addr %s256, 128
          %s258 = scalar_lea.vmem [#allocation8], %s257
          %s260 = ssub.s32 2048, 2048
          %261 = vsyncadd %s255, %s260
          %s262 = smul.addr %s29, 16
          %s263 = smul.addr %s262, 128
          %s264 = scalar_lea.hbm %s3, %s263
          %s265 = sshll.u32 %s258, 4
          %s266 = int_to_ptr.vmem [resolvable:$true] %s265
          %271 = dma.hbm_to_vmem [thread:$0]  %s264, 2048, %s266, %s255, 128, 128, 8
        $region32: #{tpu_custom_call.1} parent=15 // pred_fallthru
          _
      $region16: #{tpu_custom_call.1} parent=5 // pred_fallthru
        _
      %p272 = scmp.le.s32.totalorder 1, %s22
      %p273 = scmp.lt.s32.totalorder %s22, 5
      %p274 = pnand %p272, %p273
      %p275 = pneg %p274
      // Predicated region
      $region33: #{tpu_custom_call.1} parent=5 // pred_check
        _
      $region34: #{tpu_custom_call.1} parent=5 // pred_check_branch
        %277 = sbr.rel (%p274) target = $region36
      $region35: #{tpu_custom_call.1} parent=5 // pred_region
        %s278 = ssub.s32 %s22, 1
        %s279 = sand.u32 %s49, 1
        %s280 = scalar_lea.sflag [#allocation3], %s279
        %s281 = sand.u32 %s49, 1
        %s282 = smul.addr %s281, 8
        %s283 = scalar_lea.vmem [#allocation2], %s282
        // Predicated region
        $region37: #{tpu_custom_call.1} parent=35 // pred_check
          %p284 = pneg %p62
        $region38: #{tpu_custom_call.1} parent=35 // pred_check_branch
          %286 = sbr.rel (%p284) target = $region40
        $region39: #{tpu_custom_call.1} parent=35 // pred_region
          %287 = dma.done %s280, 128
        $region40: #{tpu_custom_call.1} parent=35 // pred_fallthru
          _
        %s288 = sand.u32 %s27, 1
        %s289 = scalar_lea.sflag [#allocation6], %s288
        %s290 = sand.u32 %s77, 1
        %s291 = smul.addr %s290, 8
        %s292 = scalar_lea.vmem [#allocation5], %s291
        // Predicated region
        $region41: #{tpu_custom_call.1} parent=35 // pred_check
          %p293 = pneg %p90
        $region42: #{tpu_custom_call.1} parent=35 // pred_check_branch
          %295 = sbr.rel (%p293) target = $region44
        $region43: #{tpu_custom_call.1} parent=35 // pred_region
          %296 = dma.done %s289, 128
        $region44: #{tpu_custom_call.1} parent=35 // pred_fallthru
          _
        %s297 = sand.u32 %s27, 1
        %s298 = scalar_lea.sflag [#allocation6], %s297
        %s299 = sand.u32 %s105, 1
        %s300 = smul.addr %s299, 8
        %s301 = scalar_lea.vmem [#allocation7], %s300
        // Predicated region
        $region45: #{tpu_custom_call.1} parent=35 // pred_check
          %p302 = pneg %p118
        $region46: #{tpu_custom_call.1} parent=35 // pred_check_branch
          %304 = sbr.rel (%p302) target = $region48
        $region47: #{tpu_custom_call.1} parent=35 // pred_region
          %305 = dma.done %s298, 128
        $region48: #{tpu_custom_call.1} parent=35 // pred_fallthru
          _
        %s306 = sand.u32 %s131, 1
        %s307 = scalar_lea.sflag [#allocation9], %s306
        %s308 = sand.u32 %s131, 1
        %s309 = smul.addr %s308, 128
        %s310 = scalar_lea.vmem [#allocation8], %s309
        // Predicated region
        $region49: #{tpu_custom_call.1} parent=35 // pred_check
          %p311 = pneg %p144
        $region50: #{tpu_custom_call.1} parent=35 // pred_check_branch
          %313 = sbr.rel (%p311) target = $region52
        $region51: #{tpu_custom_call.1} parent=35 // pred_region
          %314 = dma.done %s307, 2048
        $region52: #{tpu_custom_call.1} parent=35 // pred_fallthru
          _
        %s315 = sand.u32 %s49, 1
        %s316 = scalar_lea.sflag [#allocation3], %s315
        %s317 = sand.u32 %s49, 1
        %s318 = smul.addr %s317, 8
        %s319 = scalar_lea.vmem [#allocation2], %s318
        %p320 = pneg %p62
        %p321 = pneg %p59
        %s322 = sand.u32 %s27, 1
        %s323 = scalar_lea.sflag [#allocation6], %s322
        %s324 = sand.u32 %s77, 1
        %s325 = smul.addr %s324, 8
        %s326 = scalar_lea.vmem [#allocation5], %s325
        %p327 = pneg %p90
        %p328 = pneg %p87
        %s329 = sand.u32 %s27, 1
        %s330 = scalar_lea.sflag [#allocation6], %s329
        %s331 = sand.u32 %s105, 1
        %s332 = smul.addr %s331, 8
        %s333 = scalar_lea.vmem [#allocation7], %s332
        %p334 = pneg %p118
        %p335 = pneg %p115
        %s336 = sand.u32 %s131, 1
        %s337 = scalar_lea.sflag [#allocation9], %s336
        %s338 = sand.u32 %s131, 1
        %s339 = smul.addr %s338, 128
        %s340 = scalar_lea.vmem [#allocation8], %s339
        %p341 = pneg %p144
        %p342 = pneg %p141
        %p343 = pneg %p172
        %p344 = pneg %p169
        %s345 = sand.u32 %s159, 1
        %s346 = scalar_lea.sflag [#allocation4], %s345
        %s347 = sand.u32 %s159, 1
        %s348 = scalar_lea.vmem [#allocation10], %s347
        %v349 = vld [vmem:[%s283] sm:$0xff]
        %v350 = vld [vmem:[%s292] sm:$0xff]
        %v351 = vld [vmem:[%s301] sm:$0xff]
        %v352 = vld [vmem:[%s310] sm:$0xff]
        %v353 = vld [vmem:[%s310 + $0x8] sm:$0xff]
        %v354 = vld [vmem:[%s310 + $0x10] sm:$0xff]
        %v355 = vld [vmem:[%s310 + $0x18] sm:$0xff]
        %v356 = vld [vmem:[%s310 + $0x20] sm:$0xff]
        %v357 = vld [vmem:[%s310 + $0x28] sm:$0xff]
        %v358 = vld [vmem:[%s310 + $0x30] sm:$0xff]
        %v359 = vld [vmem:[%s310 + $0x38] sm:$0xff]
        %v360 = vld [vmem:[%s310 + $0x40] sm:$0xff]
        %v361 = vld [vmem:[%s310 + $0x48] sm:$0xff]
        %v362 = vld [vmem:[%s310 + $0x50] sm:$0xff]
        %v363 = vld [vmem:[%s310 + $0x58] sm:$0xff]
        %v364 = vld [vmem:[%s310 + $0x60] sm:$0xff]
        %v365 = vld [vmem:[%s310 + $0x68] sm:$0xff]
        %v366 = vld [vmem:[%s310 + $0x70] sm:$0xff]
        %v367 = vld [vmem:[%s310 + $0x78] sm:$0xff]
        %368 = vmatprep.subr.mxu0 0.0
        %369 = vmatpush1.msra.mxu0 %v352
        %370 = vmatprep.subr.mxu0 0.0
        %371 = vmatpush1.msra.mxu0 %v353
        %372 = vmatprep.subr.mxu0 0.0
        %373 = vmatpush1.msra.mxu0 %v354
        %374 = vmatprep.subr.mxu0 0.0
        %375 = vmatpush1.msra.mxu0 %v355
        %376 = vmatprep.subr.mxu0 0.0
        %377 = vmatpush1.msra.mxu0 %v356
        %378 = vmatprep.subr.mxu0 0.0
        %379 = vmatpush1.msra.mxu0 %v357
        %380 = vmatprep.subr.mxu0 0.0
        %381 = vmatpush1.msra.mxu0 %v358
        %382 = vmatprep.subr.mxu0 0.0
        %383 = vmatpush1.msra.mxu0 %v359
        %384 = vmatprep.subr.mxu0 0.0
        %385 = vmatpush1.msra.mxu0 %v360
        %386 = vmatprep.subr.mxu0 0.0
        %387 = vmatpush1.msra.mxu0 %v361
        %388 = vmatprep.subr.mxu0 0.0
        %389 = vmatpush1.msra.mxu0 %v362
        %390 = vmatprep.subr.mxu0 0.0
        %391 = vmatpush1.msra.mxu0 %v363
        %392 = vmatprep.subr.mxu0 0.0
        %393 = vmatpush1.msra.mxu0 %v364
        %394 = vmatprep.subr.mxu0 0.0
        %395 = vmatpush1.msra.mxu0 %v365
        %396 = vmatprep.subr.mxu0 0.0
        %397 = vmatpush1.msra.mxu0 %v366
        %398 = vmatprep.subr.mxu0 0.0
        %399 = vmatpush1.msra.mxu0 %v367
        %400 = vmatprep.subr.mxu0 0.0
        %401 = vmatpush1.msra.mxu0 0.0
        %402 = vmatprep.subr.mxu0 0.0
        %403 = vmatpush1.msra.mxu0 0.0
        %404 = vmatprep.subr.mxu0 0.0
        %405 = vmatpush1.msra.mxu0 0.0
        %406 = vmatprep.subr.mxu0 0.0
        %407 = vmatpush1.msra.mxu0 0.0
        %408 = vmatprep.subr.mxu0 0.0
        %409 = vmatpush1.msra.mxu0 0.0
        %410 = vmatprep.subr.mxu0 0.0
        %411 = vmatpush1.msra.mxu0 0.0
        %412 = vmatprep.subr.mxu0 0.0
        %413 = vmatpush1.msra.mxu0 0.0
        %414 = vmatprep.subr.mxu0 0.0
        %415 = vmatpush1.msra.mxu0 0.0
        %416 = vmatprep.subr.mxu0 0.0
        %417 = vmatpush1.msra.mxu0 0.0
        %418 = vmatprep.subr.mxu0 0.0
        %419 = vmatpush1.msra.mxu0 0.0
        %420 = vmatprep.subr.mxu0 0.0
        %421 = vmatpush1.msra.mxu0 0.0
        %422 = vmatprep.subr.mxu0 0.0
        %423 = vmatpush1.msra.mxu0 0.0
        %424 = vmatprep.subr.mxu0 0.0
        %425 = vmatpush1.msra.mxu0 0.0
        %426 = vmatprep.subr.mxu0 0.0
        %427 = vmatpush1.msra.mxu0 0.0
        %428 = vmatprep.subr.mxu0 0.0
        %429 = vmatpush1.msra.mxu0 0.0
        %430 = vmatprep.subr.mxu0 0.0
        %431 = vmatpush1.msra.mxu0 0.0
        %432 = vmatprep.mubr.f32.mxu0 0.0
        %433 = vmatmul.mubr.f32.gmra.mrb[0].mxu0 %v349
        %v434 = vpop.f32.mrb[0].mxu0
        %v435 = vadd.f32 0.0, %v434
        %v436 = vpop.f32.mrb[0].mxu0
        %437 = vdwg.mxu0
        %438 = vmatprep.subr.mxu0 0.0
        %439 = vmatpush1.msra.mxu0 %v352
        %440 = vmatprep.subr.mxu0 0.0
        %441 = vmatpush1.msra.mxu0 %v353
        %442 = vmatprep.subr.mxu0 0.0
        %443 = vmatpush1.msra.mxu0 %v354
        %444 = vmatprep.subr.mxu0 0.0
        %445 = vmatpush1.msra.mxu0 %v355
        %446 = vmatprep.subr.mxu0 0.0
        %447 = vmatpush1.msra.mxu0 %v356
        %448 = vmatprep.subr.mxu0 0.0
        %449 = vmatpush1.msra.mxu0 %v357
        %450 = vmatprep.subr.mxu0 0.0
        %451 = vmatpush1.msra.mxu0 %v358
        %452 = vmatprep.subr.mxu0 0.0
        %453 = vmatpush1.msra.mxu0 %v359
        %454 = vmatprep.subr.mxu0 0.0
        %455 = vmatpush1.msra.mxu0 %v360
        %456 = vmatprep.subr.mxu0 0.0
        %457 = vmatpush1.msra.mxu0 %v361
        %458 = vmatprep.subr.mxu0 0.0
        %459 = vmatpush1.msra.mxu0 %v362
        %460 = vmatprep.subr.mxu0 0.0
        %461 = vmatpush1.msra.mxu0 %v363
        %462 = vmatprep.subr.mxu0 0.0
        %463 = vmatpush1.msra.mxu0 %v364
        %464 = vmatprep.subr.mxu0 0.0
        %465 = vmatpush1.msra.mxu0 %v365
        %466 = vmatprep.subr.mxu0 0.0
        %467 = vmatpush1.msra.mxu0 %v366
        %468 = vmatprep.subr.mxu0 0.0
        %469 = vmatpush1.msra.mxu0 %v367
        %470 = vmatprep.subr.mxu0 0.0
        %471 = vmatpush1.msra.mxu0 0.0
        %472 = vmatprep.subr.mxu0 0.0
        %473 = vmatpush1.msra.mxu0 0.0
        %474 = vmatprep.subr.mxu0 0.0
        %475 = vmatpush1.msra.mxu0 0.0
        %476 = vmatprep.subr.mxu0 0.0
        %477 = vmatpush1.msra.mxu0 0.0
        %478 = vmatprep.subr.mxu0 0.0
        %479 = vmatpush1.msra.mxu0 0.0
        %480 = vmatprep.subr.mxu0 0.0
        %481 = vmatpush1.msra.mxu0 0.0
        %482 = vmatprep.subr.mxu0 0.0
        %483 = vmatpush1.msra.mxu0 0.0
        %484 = vmatprep.subr.mxu0 0.0
        %485 = vmatpush1.msra.mxu0 0.0
        %486 = vmatprep.subr.mxu0 0.0
        %487 = vmatpush1.msra.mxu0 0.0
        %488 = vmatprep.subr.mxu0 0.0
        %489 = vmatpush1.msra.mxu0 0.0
        %490 = vmatprep.subr.mxu0 0.0
        %491 = vmatpush1.msra.mxu0 0.0
        %492 = vmatprep.subr.mxu0 0.0
        %493 = vmatpush1.msra.mxu0 0.0
        %494 = vmatprep.subr.mxu0 0.0
        %495 = vmatpush1.msra.mxu0 0.0
        %496 = vmatprep.subr.mxu0 0.0
        %497 = vmatpush1.msra.mxu0 0.0
        %498 = vmatprep.subr.mxu0 0.0
        %499 = vmatpush1.msra.mxu0 0.0
        %500 = vmatprep.subr.mxu0 0.0
        %501 = vmatpush1.msra.mxu0 0.0
        %502 = vmatprep.mubr.f32.mxu0 0.0
        %503 = vmatmul.mubr.f32.gmra.mrb[0].mxu0 %v350
        %v504 = vpop.f32.mrb[0].mxu0
        %v505 = vadd.f32 0.0, %v504
        %v506 = vpop.f32.mrb[0].mxu0
        %507 = vdwg.mxu0
        %vm508 = vcmp.gt.f32.partialorder %v351, 0.0
        %v509 = vsel %vm508, %v435, -1e+30
        %510 = vmax.xlane.f32.xlu0 %v509
        %v511 = vpop.xlane.xlu0 %510
        %v512 = vsub.f32 %v435, %v511
        %v513 = vsel %vm508, %v512, -1e+30
        %v514 = vmul.f32 %v513, 1.442695
        %v515 = vpow.pop %v514
        %516 = vadd.xlane.f32.xlu0 %v515
        %v517 = vpop.xlane.xlu0 %516
        %518 = vadd.xlane.f32.xlu0 %v351
        %v519 = vpop.xlane.xlu0 %518
        %vm520 = vcmp.gt.f32.partialorder %v517, 0.0
        %v521 = vrcp.pop %v517
        %v522 = vmul.f32 1.0, %v521
        %v523 = vsel %vm520, %v522, 0.0
        %v524 = vmul.f32 %v519, %v515
        %v525 = vmul.f32 %v524, %v523
        %v526 = vsub.f32 %v505, 1.0
        %v527 = vmul.f32 %v526, %v526
        %v528 = vmul.f32 %v525, %v527
        %v529 = vrot.slane %v528, 4
        %v530 = vadd.f32 %v528, %v529
        %v531 = vrot.slane %v530, 2
        %v532 = vadd.f32 %v530, %v531
        %v533 = vrot.slane %v532, 1
        %v534 = vadd.f32 %v532, %v533
        %535 = vst [vmem:[%s348] sm:$0x1] %v534
        %s536 = sand.u32 %s159, 1
        %s537 = scalar_lea.sflag [#allocation4], %s536
        %s538 = sand.u32 %s159, 1
        %s539 = scalar_lea.vmem [#allocation10], %s538
        // Predicated region
        $region53: #{tpu_custom_call.1} parent=35 // pred_check
          %p540 = pneg %p169
        $region54: #{tpu_custom_call.1} parent=35 // pred_check_branch
          %542 = sbr.rel (%p540) target = $region56
        $region55: #{tpu_custom_call.1} parent=35 // pred_region
          %s544 = ssub.s32 16, 16
          %545 = vsyncadd %s537, %s544
          %s546 = smul.addr %s31, 2
          %s547 = sadd.s32 %s32, %s546
          %s548 = smul.addr %s547, 16
          %s549 = scalar_lea.hbm %s4, %s548
          %s551 = sshll.u32 %s539, 4
          %s552 = int_to_ptr.vmem [resolvable:$true] %s551
          %554 = dma.vmem_to_hbm [thread:$0]  %s552, 16, %s549, %s537
        $region56: #{tpu_custom_call.1} parent=35 // pred_fallthru
          _
      $region36: #{tpu_custom_call.1} parent=5 // pred_fallthru
        _
      %p555 = scmp.le.s32.totalorder 2, %s22
      // Predicated region
      $region57: #{tpu_custom_call.1} parent=5 // pred_check
        %p556 = pneg %p555
      $region58: #{tpu_custom_call.1} parent=5 // pred_check_branch
        %558 = sbr.rel (%p556) target = $region60
      $region59: #{tpu_custom_call.1} parent=5 // pred_region
        %s559 = ssub.s32 %s22, 2
        // Predicated region
        $region61: #{tpu_custom_call.1} parent=59 // pred_check
          %p560 = pneg %p175
        $region62: #{tpu_custom_call.1} parent=59 // pred_check_branch
          %562 = sbr.rel (%p560) target = $region64
        $region63: #{tpu_custom_call.1} parent=59 // pred_region
          %s563 = sand.u32 %s160, 1
          %s564 = scalar_lea.sflag [#allocation4], %s563
          %s565 = sand.u32 %s160, 1
          %s566 = scalar_lea.vmem [#allocation10], %s565
          %567 = dma.done %s564, 16
        $region64: #{tpu_custom_call.1} parent=59 // pred_fallthru
          _
      $region60: #{tpu_custom_call.1} parent=5 // pred_fallthru
        _
    $region6: #{tpu_custom_call.1} parent=1 // loop_footer
      %s26 = sadd.s32 1, %s22
    $region7: #{tpu_custom_call.1} parent=1 // loop_footer_branch
      %21 = sbr.rel target = $region3
    $region8: #{tpu_custom_call.1} parent=1 // loop_exit
      _
    %568 = vsyncpa [#allocation3], 1
    %s569 = scalar_lea.sflag [#allocation3], 1
    %570 = vsyncpa %s569, 1
    %571 = vsyncpa [#allocation6], 1
    %s572 = scalar_lea.sflag [#allocation6], 1
    %573 = vsyncpa %s572, 1
    %574 = vsyncpa [#allocation9], 1
    %s575 = scalar_lea.sflag [#allocation9], 1
    %576 = vsyncpa %s575, 1
    %577 = vsyncpa [#allocation4], 1
    %s578 = scalar_lea.sflag [#allocation4], 1
    %579 = vsyncpa %s578, 1

</llo_original>
